<compile_context>
chip_gen: v5e
topology: v5e:2x2
jax: 0.10.0
libtpu: 0.0.40
codegen_flags: <defaults>
</compile_context>

<pallas_src>
import functools
import math

import jax
import jax.numpy as jnp
from jax.experimental import pallas as pl
from jax.experimental.pallas import tpu as pltpu


def _cdiv(a, b):
    return -(-a // b)


def _round_up(x, m):
    return _cdiv(x, m) * m


def _detect_num_tensorcores():
    """Best-effort chip detection: 2 TensorCores on v7x, 1 on v5e/v6e (and unknown)."""
    try:
        dev = jax.devices()[0]
        if dev.platform == "tpu":
            kind = (getattr(dev, "device_kind", "") or "").lower()
            if "v7" in kind or "7x" in kind:
                return 2
    except Exception:
        pass
    return 1


_NUM_CORES = _detect_num_tensorcores()
_LANE_CHOICES = (512, 256, 128)       # lane-dense minor dims (multiples of 128)
_MAX_BLOCK_ELEMS = 1 << 19            # <= 2 MiB f32 per input block (8 MiB double-buffered)
_VMEM_LIMIT_BYTES = 40 * 1024 * 1024  # headroom for big blocks + f32 temporaries on v5e


def _slide_weighted_bce(x, t, lo, hi, a2):
    """BCEWithLogits(reduction='none')(x, t) * slide modulating weight.

    lo = auto_iou - 0.1, hi = auto_iou, a2 = exp(1 - auto_iou) are runtime scalars.
    """
    # Stable BCE-with-logits: max(x,0) - x*t + log(1 + exp(-|x|)).
    # (log1p would shave ~1e-7 abs error for large |x|, but log/exp are the
    #  transcendentals guaranteed to lower on Mosaic, so we keep this form.)
    bce = jnp.maximum(x, 0.0) - x * t + jnp.log(1.0 + jnp.exp(-jnp.abs(x)))
    # b1/b2/b3 partition the real line, so this where-chain equals a1*b1 + a2*b2 + a3*b3.
    mw = jnp.where(t <= lo, 1.0, jnp.where(t < hi, a2, jnp.exp(1.0 - t)))
    return bce * mw


def _slide_sum_kernel(params_ref, pred_ref, true_ref, out_ref, acc_ref, *,
                      block_rows, lanes):
    i = pl.program_id(1)                       # reduction ("arbitrary") axis

    @pl.when(i == 0)
    def _():
        acc_ref[...] = jnp.zeros_like(acc_ref)

    lo, hi, a2 = params_ref[0], params_ref[1], params_ref[2]
    loss = _slide_weighted_bce(pred_ref[...].astype(jnp.float32),
                               true_ref[...].astype(jnp.float32), lo, hi, a2)

    # Layout-preserving partial reduce: stack (block_rows // 8) aligned 8-row slabs
    # onto an (8, lanes) accumulator. Pure vreg adds (no XLU), ~4 vreg stores per step.
    partial = loss[0:8, :]
    for k in range(1, block_rows // 8):
        partial = partial + loss[k * 8:(k + 1) * 8, :]
    acc_ref[...] += partial

    @pl.when(i == pl.num_programs(1) - 1)
    def _():
        blk_sum = jnp.sum(acc_ref[...])        # single cross-lane reduce of (8, lanes)
        out_ref[...] = jnp.ones_like(out_ref) * blk_sum   # lane-dense (8,128) partial


def _slide_none_kernel(params_ref, pred_ref, true_ref, out_ref):
    lo, hi, a2 = params_ref[0], params_ref[1], params_ref[2]
    loss = _slide_weighted_bce(pred_ref[...].astype(jnp.float32),
                               true_ref[...].astype(jnp.float32), lo, hi, a2)
    out_ref[...] = loss.astype(out_ref.dtype)


class SlideLoss:
    """JAX/Pallas port of ultralytics SlideLoss(loss_fcn=nn.BCEWithLogitsLoss())."""
    # TODO(synk): only BCEWithLogitsLoss is supported as the wrapped loss_fcn; other
    # elementwise losses would need their own in-kernel formula.

    def __init__(self, reduction="mean"):
        self.reduction = reduction

    @staticmethod
    def _plan(total, granule):
        """Choose (lanes, block_rows, blocks, num_cores, pad_elems).

        Preference order: zero padding (no wrapper-side jnp.pad copy) > use both
        TensorCores (v7x) > smaller padding > wider lanes. Blocks are capped at
        _MAX_BLOCK_ELEMS elements and (granule, 128)-aligned.
        """
        core_opts = (_NUM_CORES, 1) if _NUM_CORES > 1 else (1,)
        best = None
        for lanes in _LANE_CHOICES:
            max_rows = max(granule, (_MAX_BLOCK_ELEMS // lanes) // granule * granule)
            rows = _cdiv(total, lanes)
            rows_p = _round_up(rows, granule)
            for cores in core_opts:
                if cores == 1 and rows_p <= max_rows:
                    block_rows, blocks = rows_p, 1
                else:
                    blocks = max(cores, _cdiv(rows_p, max_rows))
                    blocks = _round_up(blocks, cores)
                    block_rows = _round_up(_cdiv(rows_p, blocks), granule)
                    blocks = _round_up(_cdiv(rows_p, block_rows), cores)
                pad = blocks * block_rows * lanes - total
                key = (pad > 0, -cores, pad, -lanes)
                if best is None or key < best[0]:
                    best = (key, (lanes, block_rows, blocks, cores, pad))
        return best[1]

    @staticmethod
    def _prepare(arr, lanes, rows_padded, total):
        flat = jnp.ravel(arr)                  # native dtype; upcast happens in-kernel
        pad = rows_padded * lanes - total
        if pad:
            flat = jnp.pad(flat, (0, pad))     # zero fill -> analytic ln(2) correction
        return flat.reshape(rows_padded, lanes)

    def __call__(self, pred, true, auto_iou=0.5):
        assert pred.shape == true.shape, "pred/true must have the same shape"
        orig_shape = pred.shape
        total = int(pred.size)

        itemsize = min(jnp.dtype(pred.dtype).itemsize, jnp.dtype(true.dtype).itemsize)
        granule = {4: 8, 2: 16, 1: 32}.get(itemsize, 8)

        lanes, block_rows, blocks, num_cores, pad = self._plan(total, granule)
        rows_padded = blocks * block_rows
        steps = blocks // num_cores

        # auto_iou is the per-batch running IoU in YOLO training: clamp it and precompute
        # the three slide constants as runtime scalars handed to the kernel through SMEM,
        # so distinct auto_iou values never retrace/recompile the pallas_call.
        a = jnp.maximum(jnp.asarray(auto_iou, jnp.float32), 0.2)
        params = jnp.stack([a - 0.1, a, jnp.exp(1.0 - a)])

        x = self._prepare(pred, lanes, rows_padded, total)
        t = self._prepare(true, lanes, rows_padded, total)

        smem_spec = pl.BlockSpec(memory_space=pltpu.MemorySpace.SMEM)

        if self.reduction == "none":
            out = pl.pallas_call(
                _slide_none_kernel,
                out_shape=jax.ShapeDtypeStruct((rows_padded, lanes), pred.dtype),
                grid_spec=pltpu.PrefetchScalarGridSpec(
                    num_scalar_prefetch=0,
                    grid=(blocks,),
                    in_specs=[smem_spec,
                              pl.BlockSpec((block_rows, lanes), lambda i: (i, 0)),
                              pl.BlockSpec((block_rows, lanes), lambda i: (i, 0))],
                    out_specs=pl.BlockSpec((block_rows, lanes), lambda i: (i, 0)),
                ),
                compiler_params=pltpu.CompilerParams(
                    dimension_semantics=("parallel",),
                    vmem_limit_bytes=_VMEM_LIMIT_BYTES),
            )(params, x, t)
            if pad:
                return out.reshape(-1)[:total].reshape(orig_shape)
            return out.reshape(orig_shape)

        kernel = functools.partial(_slide_sum_kernel,
                                   block_rows=block_rows, lanes=lanes)
        out = pl.pallas_call(
            kernel,
            out_shape=jax.ShapeDtypeStruct((num_cores * 8, 128), jnp.float32),
            grid_spec=pltpu.PrefetchScalarGridSpec(
                num_scalar_prefetch=0,
                grid=(num_cores, steps),
                in_specs=[
                    smem_spec,
                    pl.BlockSpec((block_rows, lanes),
                                 lambda p, i, s=steps: (p * s + i, 0)),
                    pl.BlockSpec((block_rows, lanes),
                                 lambda p, i, s=steps: (p * s + i, 0)),
                ],
                out_specs=pl.BlockSpec((8, 128), lambda p, i: (p, 0)),
                scratch_shapes=[pltpu.VMEM((8, lanes), jnp.float32)],
            ),
            compiler_params=pltpu.CompilerParams(
                dimension_semantics=("parallel", "arbitrary"),
                vmem_limit_bytes=_VMEM_LIMIT_BYTES),
        )(params, x, t)

        total_sum = jnp.sum(out.reshape(num_cores, 8, 128)[:, 0, 0])
        if pad:
            # jnp.pad zero-fills and mw(t=0)=1 (auto_iou >= 0.2), so every padded element
            # contributes exactly bce(0,0) = ln 2: correct analytically, no per-step mask.
            total_sum = total_sum - jnp.float32(pad * math.log(2.0))
        if self.reduction == "mean":
            return total_sum / jnp.float32(total)
        return total_sum   # 'sum'


# ----------------------- pure-JAX reference (mirrors torch) -----------------------
def _ref_slide_loss(pred, true, auto_iou=0.5, reduction="mean"):
    pred = pred.astype(jnp.float32)
    true = true.astype(jnp.float32)
    loss = jnp.maximum(pred, 0.0) - pred * true + jnp.log1p(jnp.exp(-jnp.abs(pred)))
    a = max(float(auto_iou), 0.2)
    b1 = (true <= a - 0.1).astype(jnp.float32)
    b2 = ((true > a - 0.1) & (true < a)).astype(jnp.float32)
    b3 = (true >= a).astype(jnp.float32)
    mw = 1.0 * b1 + math.exp(1.0 - a) * b2 + jnp.exp(-(true - 1.0)) * b3
    loss = loss * mw
    if reduction == "mean":
        return loss.mean()
    if reduction == "sum":
        return loss.sum()
    return loss


if __name__ == "__main__":
    key = jax.random.PRNGKey(0)
    k1, k2, k3, k4, k5, k6 = jax.random.split(key, 6)

    # Classification-style shapes (batch, anchors, num_classes), as in YOLO usage.
    B, A, NC = 2, 1024, 16
    pred = jax.random.normal(k1, (B, A, NC), dtype=jnp.float32)
    true = jax.random.uniform(k2, (B, A, NC), dtype=jnp.float32)   # IoU-scaled targets
    auto_iou = 0.55

    # mean reduction (default wrapped-loss reduction); no padding path
    out_mean = SlideLoss(reduction="mean")(pred, true, auto_iou)
    ref_mean = _ref_slide_loss(pred, true, auto_iou, "mean")

    # sum reduction on a ragged size (exercises minimal padding + analytic correction)
    pred2 = jax.random.normal(k3, (3, 700, 13), dtype=jnp.float32)
    true2 = jax.random.uniform(k4, (3, 700, 13), dtype=jnp.float32)
    out_sum = SlideLoss(reduction="sum")(pred2, true2, auto_iou)
    ref_sum = _ref_slide_loss(pred2, true2, auto_iou, "sum")

    # 'none' reduction (elementwise output, no padding -> no post-slice)
    out_none = SlideLoss(reduction="none")(pred, true, auto_iou)
    ref_none = _ref_slide_loss(pred, true, auto_iou, "none")

    # bf16 inputs in their native dtype, and a different runtime auto_iou value
    predb = jax.random.normal(k5, (B, A, NC), dtype=jnp.bfloat16)
    trueb = jax.random.uniform(k6, (B, A, NC), dtype=jnp.bfloat16)
    out_bf = SlideLoss(reduction="mean")(predb, trueb, 0.65)
    ref_bf = _ref_slide_loss(predb, trueb, 0.65, "mean")

    jax.block_until_ready((out_mean, out_sum, out_none, out_bf))

    assert jnp.allclose(out_mean, ref_mean, rtol=1e-4, atol=1e-5), (out_mean, ref_mean)
    assert jnp.allclose(out_sum, ref_sum, rtol=1e-4, atol=5e-2), (out_sum, ref_sum)
    assert jnp.allclose(out_none, ref_none, rtol=1e-4, atol=1e-5)
    assert jnp.allclose(out_bf, ref_bf, rtol=1e-3, atol=1e-4), (out_bf, ref_bf)
    print("KERNEL_OK")
</pallas_src>

<mosaic_0001>
module attributes {stable_mosaic.version = 11 : i64} {
  func.func @_slide_sum_kernel(%arg0: i32, %arg1: i32, %arg2: memref<3xf32, #tpu.memory_space<smem>>, %arg3: memref<64x512xf32, #tpu.memory_space<vmem>>, %arg4: memref<64x512xf32, #tpu.memory_space<vmem>>, %arg5: memref<8x128xf32, #tpu.memory_space<vmem>>, %arg6: memref<8x512xf32, #tpu.memory_space<vmem>>) attributes {dimension_semantics = [#tpu.dimension_semantics<parallel>, #tpu.dimension_semantics<arbitrary>], iteration_bounds = array<i64: 1, 1>, scalar_prefetch = 0 : i64, scratch_operands = 1 : i64, tpu.core_type = #tpu.core_type<tc>, window_params = [{transform_indices = @transform_0, window_bounds = array<i64: 3>}, {transform_indices = @transform_1, window_bounds = array<i64: 64, 512>}, {transform_indices = @transform_2, window_bounds = array<i64: 64, 512>}, {transform_indices = @transform_3, window_bounds = array<i64: 8, 128>}]} {
    %c0_i32 = arith.constant 0 : i32
    %0 = arith.cmpi eq, %arg1, %c0_i32 : i32
    %1 = arith.extui %0 : i1 to i32
    %c0_i32_0 = arith.constant 0 : i32
    %2 = arith.cmpi ne, %1, %c0_i32_0 : i32
    scf.if %2 {
      %cst_15 = arith.constant 0.000000e+00 : f32
      %53 = vector.broadcast %cst_15 : f32 to vector<8x512xf32>
      %c0_16 = arith.constant 0 : index
      %c0_17 = arith.constant 0 : index
      %54 = vector.load %arg6[%c0_16, %c0_17] : memref<8x512xf32, #tpu.memory_space<vmem>>, vector<8x512xf32>
      tpu.vector_store %arg6[%c0_16, %c0_17], %53 {strides = array<i32>} : memref<8x512xf32, #tpu.memory_space<vmem>>, vector<8x512xf32>,
    } else {
    }
    %c0 = arith.constant 0 : index
    %3 = memref.load %arg2[%c0] : memref<3xf32, #tpu.memory_space<smem>>
    %c1 = arith.constant 1 : index
    %4 = memref.load %arg2[%c1] : memref<3xf32, #tpu.memory_space<smem>>
    %c2 = arith.constant 2 : index
    %5 = memref.load %arg2[%c2] : memref<3xf32, #tpu.memory_space<smem>>
    %c0_1 = arith.constant 0 : index
    %c0_2 = arith.constant 0 : index
    %6 = vector.load %arg3[%c0_1, %c0_2] : memref<64x512xf32, #tpu.memory_space<vmem>>, vector<64x512xf32>
    %c0_3 = arith.constant 0 : index
    %c0_4 = arith.constant 0 : index
    %7 = vector.load %arg4[%c0_3, %c0_4] : memref<64x512xf32, #tpu.memory_space<vmem>>, vector<64x512xf32>
    %cst = arith.constant 0.000000e+00 : f32
    %8 = vector.broadcast %cst : f32 to vector<64x512xf32>
    %9 = arith.maximumf %6, %8 : vector<64x512xf32>
    %10 = arith.mulf %6, %7 : vector<64x512xf32>
    %11 = arith.subf %9, %10 : vector<64x512xf32>
    %12 = math.absf %6 : vector<64x512xf32>
    %cst_5 = arith.constant 0.000000e+00 : f32
    %13 = vector.broadcast %cst_5 : f32 to vector<64x512xf32>
    %14 = arith.subf %13, %12 : vector<64x512xf32>
    %15 = math.exp %14 : vector<64x512xf32>
    %cst_6 = arith.constant 1.000000e+00 : f32
    %16 = vector.broadcast %cst_6 : f32 to vector<64x512xf32>
    %17 = arith.addf %16, %15 : vector<64x512xf32>
    %18 = math.log %17 : vector<64x512xf32>
    %19 = arith.addf %11, %18 : vector<64x512xf32>
    %20 = vector.broadcast %3 : f32 to vector<64x512xf32>
    %21 = arith.cmpf ole, %7, %20 : vector<64x512xf32>
    %22 = vector.broadcast %4 : f32 to vector<64x512xf32>
    %23 = arith.cmpf olt, %7, %22 : vector<64x512xf32>
    %cst_7 = arith.constant 1.000000e+00 : f32
    %24 = vector.broadcast %cst_7 : f32 to vector<64x512xf32>
    %25 = arith.subf %24, %7 : vector<64x512xf32>
    %26 = math.exp %25 : vector<64x512xf32>
    %27 = vector.broadcast %5 : f32 to vector<64x512xf32>
    %28 = arith.select %23, %27, %26 : vector<64x512xi1>, vector<64x512xf32>
    %cst_8 = arith.constant 1.000000e+00 : f32
    %29 = vector.broadcast %cst_8 : f32 to vector<64x512xf32>
    %30 = arith.select %21, %29, %28 : vector<64x512xi1>, vector<64x512xf32>
    %31 = arith.mulf %19, %30 : vector<64x512xf32>
    %32 = vector.extract_strided_slice %31 {offsets = [0, 0], sizes = [8, 512], strides = [1, 1]} : vector<64x512xf32> to vector<8x512xf32>
    %33 = vector.extract_strided_slice %31 {offsets = [8, 0], sizes = [8, 512], strides = [1, 1]} : vector<64x512xf32> to vector<8x512xf32>
    %34 = arith.addf %32, %33 : vector<8x512xf32>
    %35 = vector.extract_strided_slice %31 {offsets = [16, 0], sizes = [8, 512], strides = [1, 1]} : vector<64x512xf32> to vector<8x512xf32>
    %36 = arith.addf %34, %35 : vector<8x512xf32>
    %37 = vector.extract_strided_slice %31 {offsets = [24, 0], sizes = [8, 512], strides = [1, 1]} : vector<64x512xf32> to vector<8x512xf32>
    %38 = arith.addf %36, %37 : vector<8x512xf32>
    %39 = vector.extract_strided_slice %31 {offsets = [32, 0], sizes = [8, 512], strides = [1, 1]} : vector<64x512xf32> to vector<8x512xf32>
    %40 = arith.addf %38, %39 : vector<8x512xf32>
    %41 = vector.extract_strided_slice %31 {offsets = [40, 0], sizes = [8, 512], strides = [1, 1]} : vector<64x512xf32> to vector<8x512xf32>
    %42 = arith.addf %40, %41 : vector<8x512xf32>
    %43 = vector.extract_strided_slice %31 {offsets = [48, 0], sizes = [8, 512], strides = [1, 1]} : vector<64x512xf32> to vector<8x512xf32>
    %44 = arith.addf %42, %43 : vector<8x512xf32>
    %45 = vector.extract_strided_slice %31 {offsets = [56, 0], sizes = [8, 512], strides = [1, 1]} : vector<64x512xf32> to vector<8x512xf32>
    %46 = arith.addf %44, %45 : vector<8x512xf32>
    %c0_9 = arith.constant 0 : index
    %c0_10 = arith.constant 0 : index
    %47 = vector.load %arg6[%c0_9, %c0_10] : memref<8x512xf32, #tpu.memory_space<vmem>>, vector<8x512xf32>
    %48 = arith.addf %47, %46 : vector<8x512xf32>
    %c0_11 = arith.constant 0 : index
    %c0_12 = arith.constant 0 : index
    %49 = vector.load %arg6[%c0_11, %c0_12] : memref<8x512xf32, #tpu.memory_space<vmem>>, vector<8x512xf32>
    tpu.vector_store %arg6[%c0_11, %c0_12], %48 {strides = array<i32>} : memref<8x512xf32, #tpu.memory_space<vmem>>, vector<8x512xf32>,
    %c0_i32_13 = arith.constant 0 : i32
    %50 = arith.cmpi eq, %arg1, %c0_i32_13 : i32
    %51 = arith.extui %50 : i1 to i32
    %c0_i32_14 = arith.constant 0 : i32
    %52 = arith.cmpi ne, %51, %c0_i32_14 : i32
    scf.if %52 {
      %c0_15 = arith.constant 0 : index
      %c0_16 = arith.constant 0 : index
      %53 = vector.load %arg6[%c0_15, %c0_16] : memref<8x512xf32, #tpu.memory_space<vmem>>, vector<8x512xf32>
      %54 = vector.shape_cast %53 : vector<8x512xf32> to vector<1x8x512xf32>
      %cst_17 = arith.constant dense<0.000000e+00> : vector<1xf32>
      %55 = vector.multi_reduction <add>, %54, %cst_17 [1, 2] : vector<1x8x512xf32> to vector<1xf32>
      %56 = vector.shape_cast %55 : vector<1xf32> to vector<1x1x1xf32>
      %57 = vector.extract %56[0, 0, 0] : f32 from vector<1x1x1xf32>
      %cst_18 = arith.constant 1.000000e+00 : f32
      %58 = vector.broadcast %cst_18 : f32 to vector<8x128xf32>
      %59 = vector.broadcast %57 : f32 to vector<8x128xf32>
      %60 = arith.mulf %58, %59 : vector<8x128xf32>
      %c0_19 = arith.constant 0 : index
      %c0_20 = arith.constant 0 : index
      %61 = vector.load %arg5[%c0_19, %c0_20] : memref<8x128xf32, #tpu.memory_space<vmem>>, vector<8x128xf32>
      tpu.vector_store %arg5[%c0_19, %c0_20], %60 {strides = array<i32>} : memref<8x128xf32, #tpu.memory_space<vmem>>, vector<8x128xf32>,
    } else {
    }
    return
  }
  func.func @transform_0(%arg0: i32, %arg1: i32) -> i32 {
    %c0_i32 = arith.constant 0 : i32
    %c0_i32_0 = arith.constant 0 : i32
    return %c0_i32 : i32
  }
  func.func @transform_1(%arg0: i32, %arg1: i32) -> (i32, i32) {
    %c1_i32 = arith.constant 1 : i32
    %0 = arith.muli %arg0, %c1_i32 : i32
    %1 = arith.addi %0, %arg1 : i32
    %c0_i32 = arith.constant 0 : i32
    %c0_i32_0 = arith.constant 0 : i32
    return %1, %c0_i32 : i32, i32
  }
  func.func @transform_2(%arg0: i32, %arg1: i32) -> (i32, i32) {
    %c1_i32 = arith.constant 1 : i32
    %0 = arith.muli %arg0, %c1_i32 : i32
    %1 = arith.addi %0, %arg1 : i32
    %c0_i32 = arith.constant 0 : i32
    %c0_i32_0 = arith.constant 0 : i32
    return %1, %c0_i32 : i32, i32
  }
  func.func @transform_3(%arg0: i32, %arg1: i32) -> (i32, i32) {
    %c0_i32 = arith.constant 0 : i32
    %c0_i32_0 = arith.constant 0 : i32
    return %arg0, %c0_i32 : i32, i32
  }
}

</mosaic_0001>

<llo_original>
// kernel: tpu_custom_call.1
$region0: #{tpu_custom_call.1}
  #allocation0 [shape = 'u32[]', space=smem, size = 0x4, offset = 0x4, fixed_abs, tag = 'smem constant byte address 0x4 - core index']
  #allocation1 [shape = 'u32[72,128]{1,0:T(1,128)}', space=vmem, size = 0x9000, scoped, tag = 'internal scratch']
  #allocation2 [shape = 'f32[8,512]{1,0:T(8,128)}', space=vmem, size = 0x4000, scoped, tag = 'scratch operand']
  %s0 = inlined_call_operand.hbm [shape: f32[3], index: 0, kind: input, shape index: {}]
  %s1 = inlined_call_operand.hbm [shape: f32[64,512], index: 1, kind: input, shape index: {}]
  %s2 = inlined_call_operand.hbm [shape: f32[64,512], index: 2, kind: input, shape index: {}]
  %s3 = inlined_call_operand.hbm [shape: f32[8,128], index: 3, kind: output, shape index: {}]
  %s4 = sld [smem:[#allocation0]]
  $region42: #{tpu_custom_call.1} parent=0
    _
  %s6 = ssub.s32 1, %s4
  %s7 = scalar_select 0, %s6, %s4
  $region1: #{tpu_custom_call.1} parent=0
    #allocation3 [shape = 'u8[512]{0}', space=smem, size = 0x200, scoped, tag = 'input window, operand 0, single buffered']
    #allocation4 [shape = 's32[1]{0}', space=sflag, size = 0x4, scoped, tag = 'scoped memory for tpu_custom_call.1']
    #allocation5 [shape = 's32[1]{0}', space=sflag, size = 0x4, scoped, tag = 'scoped memory for tpu_custom_call.1']
    #allocation6 [shape = 's32[1]{0}', space=sflag, size = 0x4, scoped, tag = 'scoped memory for tpu_custom_call.1']
    #allocation7 [shape = 'u8[131072]{0}', space=vmem, size = 0x20000, scoped, tag = 'input window, operand 1, single buffered']
    #allocation8 [shape = 'u8[131072]{0}', space=vmem, size = 0x20000, scoped, tag = 'input window, operand 2, single buffered']
    #allocation9 [shape = 's32[1]{0}', space=sflag, size = 0x4, scoped, tag = 'scoped memory for tpu_custom_call.1']
    #allocation10 [shape = 'u8[4096]{0}', space=vmem, size = 0x1000, scoped, tag = 'output window, operand 0, single buffered']
    %8 = vsyncpa [#allocation6], 0
    %9 = vsyncpa [#allocation4], 0
    %10 = vsyncpa [#allocation9], 0
    %11 = vsyncpa [#allocation5], 0
    // Predicated region
    $region2: #{tpu_custom_call.1} parent=1 // pred_check
      _
    $region3: #{tpu_custom_call.1} parent=1 // pred_check_branch
      %13 = sbr.rel (0) target = $region5
    $region4: #{tpu_custom_call.1} parent=1 // pred_region
      %15 = vsyncadd [#allocation6], 0
      %s17 = sshll.u32 %s0, 4
      %s18 = int_to_ptr.hbm [resolvable:$true] %s17
      %20 = dma.hbm_to_smem %s18, 16, [#allocation3], [#allocation6]
    $region5: #{tpu_custom_call.1} parent=1 // pred_fallthru
      _
    // Predicated region
    $region6: #{tpu_custom_call.1} parent=1 // pred_check
      _
    $region7: #{tpu_custom_call.1} parent=1 // pred_check_branch
      %22 = sbr.rel (0) target = $region9
    $region8: #{tpu_custom_call.1} parent=1 // pred_region
      %s23 = sadd.s32 0, 0
      %s24 = smul.u32 8, %s23
      %26 = vsyncadd [#allocation4], 0
      %s27 = smul.addr %s24, 4
      %s28 = smul.addr %s27, 8
      %s29 = scalar_lea.hbm %s1, %s28
      %s30 = sshll.u32 %s29, 4
      %s31 = int_to_ptr.hbm [resolvable:$true] %s30
      %s32 = sshll.u32 [#allocation7], 4
      %s33 = int_to_ptr.vmem [resolvable:$true] %s32
      %38 = dma.hbm_to_vmem [thread:$0]  %s31, 4096, %s33, [#allocation4], 512, 512, 32
    $region9: #{tpu_custom_call.1} parent=1 // pred_fallthru
      _
    // Predicated region
    $region10: #{tpu_custom_call.1} parent=1 // pred_check
      _
    $region11: #{tpu_custom_call.1} parent=1 // pred_check_branch
      %40 = sbr.rel (0) target = $region13
    $region12: #{tpu_custom_call.1} parent=1 // pred_region
      %s41 = sadd.s32 0, 0
      %s42 = smul.u32 8, %s41
      %44 = vsyncadd [#allocation9], 0
      %s45 = smul.addr %s42, 4
      %s46 = smul.addr %s45, 8
      %s47 = scalar_lea.hbm %s2, %s46
      %s48 = sshll.u32 %s47, 4
      %s49 = int_to_ptr.hbm [resolvable:$true] %s48
      %s50 = sshll.u32 [#allocation8], 4
      %s51 = int_to_ptr.vmem [resolvable:$true] %s50
      %56 = dma.hbm_to_vmem [thread:$0]  %s49, 4096, %s51, [#allocation9], 512, 512, 32
    $region13: #{tpu_custom_call.1} parent=1 // pred_fallthru
      _
    // Predicated region
    $region14: #{tpu_custom_call.1} parent=1 // pred_check
      _
    $region15: #{tpu_custom_call.1} parent=1 // pred_check_branch
      %58 = sbr.rel (0) target = $region17
    $region16: #{tpu_custom_call.1} parent=1 // pred_region
      %60 = dma.done [#allocation6], 16
    $region17: #{tpu_custom_call.1} parent=1 // pred_fallthru
      _
    // Predicated region
    $region18: #{tpu_custom_call.1} parent=1 // pred_check
      _
    $region19: #{tpu_custom_call.1} parent=1 // pred_check_branch
      %62 = sbr.rel (0) target = $region21
    $region20: #{tpu_custom_call.1} parent=1 // pred_region
      %64 = dma.done [#allocation4], 4096
    $region21: #{tpu_custom_call.1} parent=1 // pred_fallthru
      _
    // Predicated region
    $region22: #{tpu_custom_call.1} parent=1 // pred_check
      _
    $region23: #{tpu_custom_call.1} parent=1 // pred_check_branch
      %66 = sbr.rel (0) target = $region25
    $region24: #{tpu_custom_call.1} parent=1 // pred_region
      %68 = dma.done [#allocation9], 4096
    $region25: #{tpu_custom_call.1} parent=1 // pred_fallthru
      _
    %69 = sfence
    %s70 = sadd.s32 0, 0
    %s71 = smul.u32 8, %s70
    %s72 = sadd.s32 0, 0
    %s73 = smul.u32 8, %s72
    %p74 = scmp.eq.s32.totalorder 0, 0
    // Predicated region
    $region26: #{tpu_custom_call.1} parent=1 // pred_check
      %p75 = pneg %p74
    $region27: #{tpu_custom_call.1} parent=1 // pred_check_branch
      %77 = sbr.rel (%p75) target = $region29
    $region28: #{tpu_custom_call.1} parent=1 // pred_region
      %78 = vst [vmem:[#allocation2] sm:$0xff] 0.0
      %79 = vst [vmem:[#allocation2 + $0x8] sm:$0xff] 0.0
      %80 = vst [vmem:[#allocation2 + $0x10] sm:$0xff] 0.0
      %81 = vst [vmem:[#allocation2 + $0x18] sm:$0xff] 0.0
    $region29: #{tpu_custom_call.1} parent=1 // pred_fallthru
      _
    %s82 = sld [smem:[#allocation3]]
    %s83 = sld [smem:[#allocation3 + $0x1]]
    %s84 = sld [smem:[#allocation3 + $0x2]]
    %v85 = vld [vmem:[#allocation7] sm:$0xff]
    %v86 = vld [vmem:[#allocation7 + $0x8] sm:$0xff]
    %v87 = vld [vmem:[#allocation7 + $0x10] sm:$0xff]
    %v88 = vld [vmem:[#allocation7 + $0x18] sm:$0xff]
    %v89 = vld [vmem:[#allocation7 + $0x20] sm:$0xff]
    %v90 = vld [vmem:[#allocation7 + $0x28] sm:$0xff]
    %v91 = vld [vmem:[#allocation7 + $0x30] sm:$0xff]
    %v92 = vld [vmem:[#allocation7 + $0x38] sm:$0xff]
    %v93 = vld [vmem:[#allocation7 + $0x40] sm:$0xff]
    %v94 = vld [vmem:[#allocation7 + $0x48] sm:$0xff]
    %v95 = vld [vmem:[#allocation7 + $0x50] sm:$0xff]
    %v96 = vld [vmem:[#allocation7 + $0x58] sm:$0xff]
    %v97 = vld [vmem:[#allocation7 + $0x60] sm:$0xff]
    %v98 = vld [vmem:[#allocation7 + $0x68] sm:$0xff]
    %v99 = vld [vmem:[#allocation7 + $0x70] sm:$0xff]
    %v100 = vld [vmem:[#allocation7 + $0x78] sm:$0xff]
    %v101 = vld [vmem:[#allocation7 + $0x80] sm:$0xff]
    %v102 = vld [vmem:[#allocation7 + $0x88] sm:$0xff]
    %v103 = vld [vmem:[#allocation7 + $0x90] sm:$0xff]
    %v104 = vld [vmem:[#allocation7 + $0x98] sm:$0xff]
    %v105 = vld [vmem:[#allocation7 + $0xa0] sm:$0xff]
    %v106 = vld [vmem:[#allocation7 + $0xa8] sm:$0xff]
    %v107 = vld [vmem:[#allocation7 + $0xb0] sm:$0xff]
    %v108 = vld [vmem:[#allocation7 + $0xb8] sm:$0xff]
    %v109 = vld [vmem:[#allocation7 + $0xc0] sm:$0xff]
    %v110 = vld [vmem:[#allocation7 + $0xc8] sm:$0xff]
    %v111 = vld [vmem:[#allocation7 + $0xd0] sm:$0xff]
    %v112 = vld [vmem:[#allocation7 + $0xd8] sm:$0xff]
    %v113 = vld [vmem:[#allocation7 + $0xe0] sm:$0xff]
    %v114 = vld [vmem:[#allocation7 + $0xe8] sm:$0xff]
    %v115 = vld [vmem:[#allocation7 + $0xf0] sm:$0xff]
    %v116 = vld [vmem:[#allocation7 + $0xf8] sm:$0xff]
    %v117 = vld [vmem:[#allocation8] sm:$0xff]
    %v118 = vld [vmem:[#allocation8 + $0x8] sm:$0xff]
    %v119 = vld [vmem:[#allocation8 + $0x10] sm:$0xff]
    %v120 = vld [vmem:[#allocation8 + $0x18] sm:$0xff]
    %v121 = vld [vmem:[#allocation8 + $0x20] sm:$0xff]
    %v122 = vld [vmem:[#allocation8 + $0x28] sm:$0xff]
    %v123 = vld [vmem:[#allocation8 + $0x30] sm:$0xff]
    %v124 = vld [vmem:[#allocation8 + $0x38] sm:$0xff]
    %v125 = vld [vmem:[#allocation8 + $0x40] sm:$0xff]
    %v126 = vld [vmem:[#allocation8 + $0x48] sm:$0xff]
    %v127 = vld [vmem:[#allocation8 + $0x50] sm:$0xff]
    %v128 = vld [vmem:[#allocation8 + $0x58] sm:$0xff]
    %v129 = vld [vmem:[#allocation8 + $0x60] sm:$0xff]
    %v130 = vld [vmem:[#allocation8 + $0x68] sm:$0xff]
    %v131 = vld [vmem:[#allocation8 + $0x70] sm:$0xff]
    %v132 = vld [vmem:[#allocation8 + $0x78] sm:$0xff]
    %v133 = vld [vmem:[#allocation8 + $0x80] sm:$0xff]
    %v134 = vld [vmem:[#allocation8 + $0x88] sm:$0xff]
    %v135 = vld [vmem:[#allocation8 + $0x90] sm:$0xff]
    %v136 = vld [vmem:[#allocation8 + $0x98] sm:$0xff]
    %v137 = vld [vmem:[#allocation8 + $0xa0] sm:$0xff]
    %v138 = vld [vmem:[#allocation8 + $0xa8] sm:$0xff]
    %v139 = vld [vmem:[#allocation8 + $0xb0] sm:$0xff]
    %v140 = vld [vmem:[#allocation8 + $0xb8] sm:$0xff]
    %v141 = vld [vmem:[#allocation8 + $0xc0] sm:$0xff]
    %v142 = vld [vmem:[#allocation8 + $0xc8] sm:$0xff]
    %v143 = vld [vmem:[#allocation8 + $0xd0] sm:$0xff]
    %v144 = vld [vmem:[#allocation8 + $0xd8] sm:$0xff]
    %v145 = vld [vmem:[#allocation8 + $0xe0] sm:$0xff]
    %v146 = vld [vmem:[#allocation8 + $0xe8] sm:$0xff]
    %v147 = vld [vmem:[#allocation8 + $0xf0] sm:$0xff]
    %v148 = vld [vmem:[#allocation8 + $0xf8] sm:$0xff]
    %v149 = vmax.f32 %v85, 0.0
    %v150 = vmax.f32 %v86, 0.0
    %v151 = vmax.f32 %v87, 0.0
    %v152 = vmax.f32 %v88, 0.0
    %v153 = vmax.f32 %v89, 0.0
    %v154 = vmax.f32 %v90, 0.0
    %v155 = vmax.f32 %v91, 0.0
    %v156 = vmax.f32 %v92, 0.0
    %v157 = vmax.f32 %v93, 0.0
    %v158 = vmax.f32 %v94, 0.0
    %v159 = vmax.f32 %v95, 0.0
    %v160 = vmax.f32 %v96, 0.0
    %v161 = vmax.f32 %v97, 0.0
    %v162 = vmax.f32 %v98, 0.0
    %v163 = vmax.f32 %v99, 0.0
    %v164 = vmax.f32 %v100, 0.0
    %v165 = vmax.f32 %v101, 0.0
    %v166 = vmax.f32 %v102, 0.0
    %v167 = vmax.f32 %v103, 0.0
    %v168 = vmax.f32 %v104, 0.0
    %v169 = vmax.f32 %v105, 0.0
    %v170 = vmax.f32 %v106, 0.0
    %v171 = vmax.f32 %v107, 0.0
    %v172 = vmax.f32 %v108, 0.0
    %v173 = vmax.f32 %v109, 0.0
    %v174 = vmax.f32 %v110, 0.0
    %v175 = vmax.f32 %v111, 0.0
    %v176 = vmax.f32 %v112, 0.0
    %v177 = vmax.f32 %v113, 0.0
    %v178 = vmax.f32 %v114, 0.0
    %v179 = vmax.f32 %v115, 0.0
    %v180 = vmax.f32 %v116, 0.0
    %v181 = vmul.f32 %v85, %v117
    %v182 = vmul.f32 %v86, %v118
    %v183 = vmul.f32 %v87, %v119
    %v184 = vmul.f32 %v88, %v120
    %v185 = vmul.f32 %v89, %v121
    %v186 = vmul.f32 %v90, %v122
    %v187 = vmul.f32 %v91, %v123
    %v188 = vmul.f32 %v92, %v124
    %v189 = vmul.f32 %v93, %v125
    %v190 = vmul.f32 %v94, %v126
    %v191 = vmul.f32 %v95, %v127
    %v192 = vmul.f32 %v96, %v128
    %v193 = vmul.f32 %v97, %v129
    %v194 = vmul.f32 %v98, %v130
    %v195 = vmul.f32 %v99, %v131
    %v196 = vmul.f32 %v100, %v132
    %v197 = vmul.f32 %v101, %v133
    %v198 = vmul.f32 %v102, %v134
    %v199 = vmul.f32 %v103, %v135
    %v200 = vmul.f32 %v104, %v136
    %v201 = vmul.f32 %v105, %v137
    %v202 = vmul.f32 %v106, %v138
    %v203 = vmul.f32 %v107, %v139
    %v204 = vmul.f32 %v108, %v140
    %v205 = vmul.f32 %v109, %v141
    %v206 = vmul.f32 %v110, %v142
    %v207 = vmul.f32 %v111, %v143
    %v208 = vmul.f32 %v112, %v144
    %v209 = vmul.f32 %v113, %v145
    %v210 = vmul.f32 %v114, %v146
    %v211 = vmul.f32 %v115, %v147
    %v212 = vmul.f32 %v116, %v148
    %v213 = vsub.f32 %v149, %v181
    %v214 = vsub.f32 %v150, %v182
    %v215 = vsub.f32 %v151, %v183
    %v216 = vsub.f32 %v152, %v184
    %v217 = vsub.f32 %v153, %v185
    %v218 = vsub.f32 %v154, %v186
    %v219 = vsub.f32 %v155, %v187
    %v220 = vsub.f32 %v156, %v188
    %v221 = vsub.f32 %v157, %v189
    %v222 = vsub.f32 %v158, %v190
    %v223 = vsub.f32 %v159, %v191
    %v224 = vsub.f32 %v160, %v192
    %v225 = vsub.f32 %v161, %v193
    %v226 = vsub.f32 %v162, %v194
    %v227 = vsub.f32 %v163, %v195
    %v228 = vsub.f32 %v164, %v196
    %v229 = vsub.f32 %v165, %v197
    %v230 = vsub.f32 %v166, %v198
    %v231 = vsub.f32 %v167, %v199
    %v232 = vsub.f32 %v168, %v200
    %v233 = vsub.f32 %v169, %v201
    %v234 = vsub.f32 %v170, %v202
    %v235 = vsub.f32 %v171, %v203
    %v236 = vsub.f32 %v172, %v204
    %v237 = vsub.f32 %v173, %v205
    %v238 = vsub.f32 %v174, %v206
    %v239 = vsub.f32 %v175, %v207
    %v240 = vsub.f32 %v176, %v208
    %v241 = vsub.f32 %v177, %v209
    %v242 = vsub.f32 %v178, %v210
    %v243 = vsub.f32 %v179, %v211
    %v244 = vsub.f32 %v180, %v212
    %v245 = vand.u32 2147483647, %v85
    %v246 = vand.u32 2147483647, %v86
    %v247 = vand.u32 2147483647, %v87
    %v248 = vand.u32 2147483647, %v88
    %v249 = vand.u32 2147483647, %v89
    %v250 = vand.u32 2147483647, %v90
    %v251 = vand.u32 2147483647, %v91
    %v252 = vand.u32 2147483647, %v92
    %v253 = vand.u32 2147483647, %v93
    %v254 = vand.u32 2147483647, %v94
    %v255 = vand.u32 2147483647, %v95
    %v256 = vand.u32 2147483647, %v96
    %v257 = vand.u32 2147483647, %v97
    %v258 = vand.u32 2147483647, %v98
    %v259 = vand.u32 2147483647, %v99
    %v260 = vand.u32 2147483647, %v100
    %v261 = vand.u32 2147483647, %v101
    %v262 = vand.u32 2147483647, %v102
    %v263 = vand.u32 2147483647, %v103
    %v264 = vand.u32 2147483647, %v104
    %v265 = vand.u32 2147483647, %v105
    %v266 = vand.u32 2147483647, %v106
    %v267 = vand.u32 2147483647, %v107
    %v268 = vand.u32 2147483647, %v108
    %v269 = vand.u32 2147483647, %v109
    %v270 = vand.u32 2147483647, %v110
    %v271 = vand.u32 2147483647, %v111
    %v272 = vand.u32 2147483647, %v112
    %v273 = vand.u32 2147483647, %v113
    %v274 = vand.u32 2147483647, %v114
    %v275 = vand.u32 2147483647, %v115
    %v276 = vand.u32 2147483647, %v116
    %v277 = vsub.f32 0.0, %v245
    %v278 = vsub.f32 0.0, %v246
    %v279 = vsub.f32 0.0, %v247
    %v280 = vsub.f32 0.0, %v248
    %v281 = vsub.f32 0.0, %v249
    %v282 = vsub.f32 0.0, %v250
    %v283 = vsub.f32 0.0, %v251
    %v284 = vsub.f32 0.0, %v252
    %v285 = vsub.f32 0.0, %v253
    %v286 = vsub.f32 0.0, %v254
    %v287 = vsub.f32 0.0, %v255
    %v288 = vsub.f32 0.0, %v256
    %v289 = vsub.f32 0.0, %v257
    %v290 = vsub.f32 0.0, %v258
    %v291 = vsub.f32 0.0, %v259
    %v292 = vsub.f32 0.0, %v260
    %v293 = vsub.f32 0.0, %v261
    %v294 = vsub.f32 0.0, %v262
    %v295 = vsub.f32 0.0, %v263
    %v296 = vsub.f32 0.0, %v264
    %v297 = vsub.f32 0.0, %v265
    %v298 = vsub.f32 0.0, %v266
    %v299 = vsub.f32 0.0, %v267
    %v300 = vsub.f32 0.0, %v268
    %v301 = vsub.f32 0.0, %v269
    %v302 = vsub.f32 0.0, %v270
    %v303 = vsub.f32 0.0, %v271
    %v304 = vsub.f32 0.0, %v272
    %v305 = vsub.f32 0.0, %v273
    %v306 = vsub.f32 0.0, %v274
    %v307 = vsub.f32 0.0, %v275
    %v308 = vsub.f32 0.0, %v276
    %v309 = vmul.f32 %v277, 1.442695
    %v310 = vpow.pop %v309
    %v311 = vmul.f32 %v278, 1.442695
    %v312 = vpow.pop %v311
    %v313 = vmul.f32 %v279, 1.442695
    %v314 = vpow.pop %v313
    %v315 = vmul.f32 %v280, 1.442695
    %v316 = vpow.pop %v315
    %v317 = vmul.f32 %v281, 1.442695
    %v318 = vpow.pop %v317
    %v319 = vmul.f32 %v282, 1.442695
    %v320 = vpow.pop %v319
    %v321 = vmul.f32 %v283, 1.442695
    %v322 = vpow.pop %v321
    %v323 = vmul.f32 %v284, 1.442695
    %v324 = vpow.pop %v323
    %v325 = vmul.f32 %v285, 1.442695
    %v326 = vpow.pop %v325
    %v327 = vmul.f32 %v286, 1.442695
    %v328 = vpow.pop %v327
    %v329 = vmul.f32 %v287, 1.442695
    %v330 = vpow.pop %v329
    %v331 = vmul.f32 %v288, 1.442695
    %v332 = vpow.pop %v331
    %v333 = vmul.f32 %v289, 1.442695
    %v334 = vpow.pop %v333
    %v335 = vmul.f32 %v290, 1.442695
    %v336 = vpow.pop %v335
    %v337 = vmul.f32 %v291, 1.442695
    %v338 = vpow.pop %v337
    %v339 = vmul.f32 %v292, 1.442695
    %v340 = vpow.pop %v339
    %v341 = vmul.f32 %v293, 1.442695
    %v342 = vpow.pop %v341
    %v343 = vmul.f32 %v294, 1.442695
    %v344 = vpow.pop %v343
    %v345 = vmul.f32 %v295, 1.442695
    %v346 = vpow.pop %v345
    %v347 = vmul.f32 %v296, 1.442695
    %v348 = vpow.pop %v347
    %v349 = vmul.f32 %v297, 1.442695
    %v350 = vpow.pop %v349
    %v351 = vmul.f32 %v298, 1.442695
    %v352 = vpow.pop %v351
    %v353 = vmul.f32 %v299, 1.442695
    %v354 = vpow.pop %v353
    %v355 = vmul.f32 %v300, 1.442695
    %v356 = vpow.pop %v355
    %v357 = vmul.f32 %v301, 1.442695
    %v358 = vpow.pop %v357
    %v359 = vmul.f32 %v302, 1.442695
    %v360 = vpow.pop %v359
    %v361 = vmul.f32 %v303, 1.442695
    %v362 = vpow.pop %v361
    %v363 = vmul.f32 %v304, 1.442695
    %v364 = vpow.pop %v363
    %v365 = vmul.f32 %v305, 1.442695
    %v366 = vpow.pop %v365
    %v367 = vmul.f32 %v306, 1.442695
    %v368 = vpow.pop %v367
    %v369 = vmul.f32 %v307, 1.442695
    %v370 = vpow.pop %v369
    %v371 = vmul.f32 %v308, 1.442695
    %v372 = vpow.pop %v371
    %v373 = vadd.f32 %v310, 1.0
    %v374 = vadd.f32 %v312, 1.0
    %v375 = vadd.f32 %v314, 1.0
    %v376 = vadd.f32 %v316, 1.0
    %v377 = vadd.f32 %v318, 1.0
    %v378 = vadd.f32 %v320, 1.0
    %v379 = vadd.f32 %v322, 1.0
    %v380 = vadd.f32 %v324, 1.0
    %v381 = vadd.f32 %v326, 1.0
    %v382 = vadd.f32 %v328, 1.0
    %v383 = vadd.f32 %v330, 1.0
    %v384 = vadd.f32 %v332, 1.0
    %v385 = vadd.f32 %v334, 1.0
    %v386 = vadd.f32 %v336, 1.0
    %v387 = vadd.f32 %v338, 1.0
    %v388 = vadd.f32 %v340, 1.0
    %v389 = vadd.f32 %v342, 1.0
    %v390 = vadd.f32 %v344, 1.0
    %v391 = vadd.f32 %v346, 1.0
    %v392 = vadd.f32 %v348, 1.0
    %v393 = vadd.f32 %v350, 1.0
    %v394 = vadd.f32 %v352, 1.0
    %v395 = vadd.f32 %v354, 1.0
    %v396 = vadd.f32 %v356, 1.0
    %v397 = vadd.f32 %v358, 1.0
    %v398 = vadd.f32 %v360, 1.0
    %v399 = vadd.f32 %v362, 1.0
    %v400 = vadd.f32 %v364, 1.0
    %v401 = vadd.f32 %v366, 1.0
    %v402 = vadd.f32 %v368, 1.0
    %v403 = vadd.f32 %v370, 1.0
    %v404 = vadd.f32 %v372, 1.0
    %v405 = vlog2.pop %v373
    %v406 = vmul.f32 %v405, 0.6931472
    %v407 = vlog2.pop %v374
    %v408 = vmul.f32 %v407, 0.6931472
    %v409 = vlog2.pop %v375
    %v410 = vmul.f32 %v409, 0.6931472
    %v411 = vlog2.pop %v376
    %v412 = vmul.f32 %v411, 0.6931472
    %v413 = vlog2.pop %v377
    %v414 = vmul.f32 %v413, 0.6931472
    %v415 = vlog2.pop %v378
    %v416 = vmul.f32 %v415, 0.6931472
    %v417 = vlog2.pop %v379
    %v418 = vmul.f32 %v417, 0.6931472
    %v419 = vlog2.pop %v380
    %v420 = vmul.f32 %v419, 0.6931472
    %v421 = vlog2.pop %v381
    %v422 = vmul.f32 %v421, 0.6931472
    %v423 = vlog2.pop %v382
    %v424 = vmul.f32 %v423, 0.6931472
    %v425 = vlog2.pop %v383
    %v426 = vmul.f32 %v425, 0.6931472
    %v427 = vlog2.pop %v384
    %v428 = vmul.f32 %v427, 0.6931472
    %v429 = vlog2.pop %v385
    %v430 = vmul.f32 %v429, 0.6931472
    %v431 = vlog2.pop %v386
    %v432 = vmul.f32 %v431, 0.6931472
    %v433 = vlog2.pop %v387
    %v434 = vmul.f32 %v433, 0.6931472
    %v435 = vlog2.pop %v388
    %v436 = vmul.f32 %v435, 0.6931472
    %v437 = vlog2.pop %v389
    %v438 = vmul.f32 %v437, 0.6931472
    %v439 = vlog2.pop %v390
    %v440 = vmul.f32 %v439, 0.6931472
    %v441 = vlog2.pop %v391
    %v442 = vmul.f32 %v441, 0.6931472
    %v443 = vlog2.pop %v392
    %v444 = vmul.f32 %v443, 0.6931472
    %v445 = vlog2.pop %v393
    %v446 = vmul.f32 %v445, 0.6931472
    %v447 = vlog2.pop %v394
    %v448 = vmul.f32 %v447, 0.6931472
    %v449 = vlog2.pop %v395
    %v450 = vmul.f32 %v449, 0.6931472
    %v451 = vlog2.pop %v396
    %v452 = vmul.f32 %v451, 0.6931472
    %v453 = vlog2.pop %v397
    %v454 = vmul.f32 %v453, 0.6931472
    %v455 = vlog2.pop %v398
    %v456 = vmul.f32 %v455, 0.6931472
    %v457 = vlog2.pop %v399
    %v458 = vmul.f32 %v457, 0.6931472
    %v459 = vlog2.pop %v400
    %v460 = vmul.f32 %v459, 0.6931472
    %v461 = vlog2.pop %v401
    %v462 = vmul.f32 %v461, 0.6931472
    %v463 = vlog2.pop %v402
    %v464 = vmul.f32 %v463, 0.6931472
    %v465 = vlog2.pop %v403
    %v466 = vmul.f32 %v465, 0.6931472
    %v467 = vlog2.pop %v404
    %v468 = vmul.f32 %v467, 0.6931472
    %v469 = vadd.f32 %v213, %v406
    %v470 = vadd.f32 %v214, %v408
    %v471 = vadd.f32 %v215, %v410
    %v472 = vadd.f32 %v216, %v412
    %v473 = vadd.f32 %v217, %v414
    %v474 = vadd.f32 %v218, %v416
    %v475 = vadd.f32 %v219, %v418
    %v476 = vadd.f32 %v220, %v420
    %v477 = vadd.f32 %v221, %v422
    %v478 = vadd.f32 %v222, %v424
    %v479 = vadd.f32 %v223, %v426
    %v480 = vadd.f32 %v224, %v428
    %v481 = vadd.f32 %v225, %v430
    %v482 = vadd.f32 %v226, %v432
    %v483 = vadd.f32 %v227, %v434
    %v484 = vadd.f32 %v228, %v436
    %v485 = vadd.f32 %v229, %v438
    %v486 = vadd.f32 %v230, %v440
    %v487 = vadd.f32 %v231, %v442
    %v488 = vadd.f32 %v232, %v444
    %v489 = vadd.f32 %v233, %v446
    %v490 = vadd.f32 %v234, %v448
    %v491 = vadd.f32 %v235, %v450
    %v492 = vadd.f32 %v236, %v452
    %v493 = vadd.f32 %v237, %v454
    %v494 = vadd.f32 %v238, %v456
    %v495 = vadd.f32 %v239, %v458
    %v496 = vadd.f32 %v240, %v460
    %v497 = vadd.f32 %v241, %v462
    %v498 = vadd.f32 %v242, %v464
    %v499 = vadd.f32 %v243, %v466
    %v500 = vadd.f32 %v244, %v468
    %v501 = vstv %s82
    %vm502 = vcmp.le.f32.partialorder %v117, %v501
    %vm503 = vcmp.le.f32.partialorder %v118, %v501
    %vm504 = vcmp.le.f32.partialorder %v119, %v501
    %vm505 = vcmp.le.f32.partialorder %v120, %v501
    %vm506 = vcmp.le.f32.partialorder %v121, %v501
    %vm507 = vcmp.le.f32.partialorder %v122, %v501
    %vm508 = vcmp.le.f32.partialorder %v123, %v501
    %vm509 = vcmp.le.f32.partialorder %v124, %v501
    %vm510 = vcmp.le.f32.partialorder %v125, %v501
    %vm511 = vcmp.le.f32.partialorder %v126, %v501
    %vm512 = vcmp.le.f32.partialorder %v127, %v501
    %vm513 = vcmp.le.f32.partialorder %v128, %v501
    %vm514 = vcmp.le.f32.partialorder %v129, %v501
    %vm515 = vcmp.le.f32.partialorder %v130, %v501
    %vm516 = vcmp.le.f32.partialorder %v131, %v501
    %vm517 = vcmp.le.f32.partialorder %v132, %v501
    %vm518 = vcmp.le.f32.partialorder %v133, %v501
    %vm519 = vcmp.le.f32.partialorder %v134, %v501
    %vm520 = vcmp.le.f32.partialorder %v135, %v501
    %vm521 = vcmp.le.f32.partialorder %v136, %v501
    %vm522 = vcmp.le.f32.partialorder %v137, %v501
    %vm523 = vcmp.le.f32.partialorder %v138, %v501
    %vm524 = vcmp.le.f32.partialorder %v139, %v501
    %vm525 = vcmp.le.f32.partialorder %v140, %v501
    %vm526 = vcmp.le.f32.partialorder %v141, %v501
    %vm527 = vcmp.le.f32.partialorder %v142, %v501
    %vm528 = vcmp.le.f32.partialorder %v143, %v501
    %vm529 = vcmp.le.f32.partialorder %v144, %v501
    %vm530 = vcmp.le.f32.partialorder %v145, %v501
    %vm531 = vcmp.le.f32.partialorder %v146, %v501
    %vm532 = vcmp.le.f32.partialorder %v147, %v501
    %vm533 = vcmp.le.f32.partialorder %v148, %v501
    %v534 = vstv %s83
    %vm535 = vcmp.lt.f32.partialorder %v117, %v534
    %vm536 = vcmp.lt.f32.partialorder %v118, %v534
    %vm537 = vcmp.lt.f32.partialorder %v119, %v534
    %vm538 = vcmp.lt.f32.partialorder %v120, %v534
    %vm539 = vcmp.lt.f32.partialorder %v121, %v534
    %vm540 = vcmp.lt.f32.partialorder %v122, %v534
    %vm541 = vcmp.lt.f32.partialorder %v123, %v534
    %vm542 = vcmp.lt.f32.partialorder %v124, %v534
    %vm543 = vcmp.lt.f32.partialorder %v125, %v534
    %vm544 = vcmp.lt.f32.partialorder %v126, %v534
    %vm545 = vcmp.lt.f32.partialorder %v127, %v534
    %vm546 = vcmp.lt.f32.partialorder %v128, %v534
    %vm547 = vcmp.lt.f32.partialorder %v129, %v534
    %vm548 = vcmp.lt.f32.partialorder %v130, %v534
    %vm549 = vcmp.lt.f32.partialorder %v131, %v534
    %vm550 = vcmp.lt.f32.partialorder %v132, %v534
    %vm551 = vcmp.lt.f32.partialorder %v133, %v534
    %vm552 = vcmp.lt.f32.partialorder %v134, %v534
    %vm553 = vcmp.lt.f32.partialorder %v135, %v534
    %vm554 = vcmp.lt.f32.partialorder %v136, %v534
    %vm555 = vcmp.lt.f32.partialorder %v137, %v534
    %vm556 = vcmp.lt.f32.partialorder %v138, %v534
    %vm557 = vcmp.lt.f32.partialorder %v139, %v534
    %vm558 = vcmp.lt.f32.partialorder %v140, %v534
    %vm559 = vcmp.lt.f32.partialorder %v141, %v534
    %vm560 = vcmp.lt.f32.partialorder %v142, %v534
    %vm561 = vcmp.lt.f32.partialorder %v143, %v534
    %vm562 = vcmp.lt.f32.partialorder %v144, %v534
    %vm563 = vcmp.lt.f32.partialorder %v145, %v534
    %vm564 = vcmp.lt.f32.partialorder %v146, %v534
    %vm565 = vcmp.lt.f32.partialorder %v147, %v534
    %vm566 = vcmp.lt.f32.partialorder %v148, %v534
    %v567 = vsub.f32 1.0, %v117
    %v568 = vsub.f32 1.0, %v118
    %v569 = vsub.f32 1.0, %v119
    %v570 = vsub.f32 1.0, %v120
    %v571 = vsub.f32 1.0, %v121
    %v572 = vsub.f32 1.0, %v122
    %v573 = vsub.f32 1.0, %v123
    %v574 = vsub.f32 1.0, %v124
    %v575 = vsub.f32 1.0, %v125
    %v576 = vsub.f32 1.0, %v126
    %v577 = vsub.f32 1.0, %v127
    %v578 = vsub.f32 1.0, %v128
    %v579 = vsub.f32 1.0, %v129
    %v580 = vsub.f32 1.0, %v130
    %v581 = vsub.f32 1.0, %v131
    %v582 = vsub.f32 1.0, %v132
    %v583 = vsub.f32 1.0, %v133
    %v584 = vsub.f32 1.0, %v134
    %v585 = vsub.f32 1.0, %v135
    %v586 = vsub.f32 1.0, %v136
    %v587 = vsub.f32 1.0, %v137
    %v588 = vsub.f32 1.0, %v138
    %v589 = vsub.f32 1.0, %v139
    %v590 = vsub.f32 1.0, %v140
    %v591 = vsub.f32 1.0, %v141
    %v592 = vsub.f32 1.0, %v142
    %v593 = vsub.f32 1.0, %v143
    %v594 = vsub.f32 1.0, %v144
    %v595 = vsub.f32 1.0, %v145
    %v596 = vsub.f32 1.0, %v146
    %v597 = vsub.f32 1.0, %v147
    %v598 = vsub.f32 1.0, %v148
    %v599 = vmul.f32 %v567, 1.442695
    %v600 = vpow.pop %v599
    %v601 = vmul.f32 %v568, 1.442695
    %v602 = vpow.pop %v601
    %v603 = vmul.f32 %v569, 1.442695
    %v604 = vpow.pop %v603
    %v605 = vmul.f32 %v570, 1.442695
    %v606 = vpow.pop %v605
    %v607 = vmul.f32 %v571, 1.442695
    %v608 = vpow.pop %v607
    %v609 = vmul.f32 %v572, 1.442695
    %v610 = vpow.pop %v609
    %v611 = vmul.f32 %v573, 1.442695
    %v612 = vpow.pop %v611
    %v613 = vmul.f32 %v574, 1.442695
    %v614 = vpow.pop %v613
    %v615 = vmul.f32 %v575, 1.442695
    %v616 = vpow.pop %v615
    %v617 = vmul.f32 %v576, 1.442695
    %v618 = vpow.pop %v617
    %v619 = vmul.f32 %v577, 1.442695
    %v620 = vpow.pop %v619
    %v621 = vmul.f32 %v578, 1.442695
    %v622 = vpow.pop %v621
    %v623 = vmul.f32 %v579, 1.442695
    %v624 = vpow.pop %v623
    %v625 = vmul.f32 %v580, 1.442695
    %v626 = vpow.pop %v625
    %v627 = vmul.f32 %v581, 1.442695
    %v628 = vpow.pop %v627
    %v629 = vmul.f32 %v582, 1.442695
    %v630 = vpow.pop %v629
    %v631 = vmul.f32 %v583, 1.442695
    %v632 = vpow.pop %v631
    %v633 = vmul.f32 %v584, 1.442695
    %v634 = vpow.pop %v633
    %v635 = vmul.f32 %v585, 1.442695
    %v636 = vpow.pop %v635
    %v637 = vmul.f32 %v586, 1.442695
    %v638 = vpow.pop %v637
    %v639 = vmul.f32 %v587, 1.442695
    %v640 = vpow.pop %v639
    %v641 = vmul.f32 %v588, 1.442695
    %v642 = vpow.pop %v641
    %v643 = vmul.f32 %v589, 1.442695
    %v644 = vpow.pop %v643
    %v645 = vmul.f32 %v590, 1.442695
    %v646 = vpow.pop %v645
    %v647 = vmul.f32 %v591, 1.442695
    %v648 = vpow.pop %v647
    %v649 = vmul.f32 %v592, 1.442695
    %v650 = vpow.pop %v649
    %v651 = vmul.f32 %v593, 1.442695
    %v652 = vpow.pop %v651
    %v653 = vmul.f32 %v594, 1.442695
    %v654 = vpow.pop %v653
    %v655 = vmul.f32 %v595, 1.442695
    %v656 = vpow.pop %v655
    %v657 = vmul.f32 %v596, 1.442695
    %v658 = vpow.pop %v657
    %v659 = vmul.f32 %v597, 1.442695
    %v660 = vpow.pop %v659
    %v661 = vmul.f32 %v598, 1.442695
    %v662 = vpow.pop %v661
    %v663 = vstv %s84
    %v664 = vsel %vm535, %v663, %v600
    %v665 = vsel %vm536, %v663, %v602
    %v666 = vsel %vm537, %v663, %v604
    %v667 = vsel %vm538, %v663, %v606
    %v668 = vsel %vm539, %v663, %v608
    %v669 = vsel %vm540, %v663, %v610
    %v670 = vsel %vm541, %v663, %v612
    %v671 = vsel %vm542, %v663, %v614
    %v672 = vsel %vm543, %v663, %v616
    %v673 = vsel %vm544, %v663, %v618
    %v674 = vsel %vm545, %v663, %v620
    %v675 = vsel %vm546, %v663, %v622
    %v676 = vsel %vm547, %v663, %v624
    %v677 = vsel %vm548, %v663, %v626
    %v678 = vsel %vm549, %v663, %v628
    %v679 = vsel %vm550, %v663, %v630
    %v680 = vsel %vm551, %v663, %v632
    %v681 = vsel %vm552, %v663, %v634
    %v682 = vsel %vm553, %v663, %v636
    %v683 = vsel %vm554, %v663, %v638
    %v684 = vsel %vm555, %v663, %v640
    %v685 = vsel %vm556, %v663, %v642
    %v686 = vsel %vm557, %v663, %v644
    %v687 = vsel %vm558, %v663, %v646
    %v688 = vsel %vm559, %v663, %v648
    %v689 = vsel %vm560, %v663, %v650
    %v690 = vsel %vm561, %v663, %v652
    %v691 = vsel %vm562, %v663, %v654
    %v692 = vsel %vm563, %v663, %v656
    %v693 = vsel %vm564, %v663, %v658
    %v694 = vsel %vm565, %v663, %v660
    %v695 = vsel %vm566, %v663, %v662
    %v696 = vsel %vm502, 1.0, %v664
    %v697 = vsel %vm503, 1.0, %v665
    %v698 = vsel %vm504, 1.0, %v666
    %v699 = vsel %vm505, 1.0, %v667
    %v700 = vsel %vm506, 1.0, %v668
    %v701 = vsel %vm507, 1.0, %v669
    %v702 = vsel %vm508, 1.0, %v670
    %v703 = vsel %vm509, 1.0, %v671
    %v704 = vsel %vm510, 1.0, %v672
    %v705 = vsel %vm511, 1.0, %v673
    %v706 = vsel %vm512, 1.0, %v674
    %v707 = vsel %vm513, 1.0, %v675
    %v708 = vsel %vm514, 1.0, %v676
    %v709 = vsel %vm515, 1.0, %v677
    %v710 = vsel %vm516, 1.0, %v678
    %v711 = vsel %vm517, 1.0, %v679
    %v712 = vsel %vm518, 1.0, %v680
    %v713 = vsel %vm519, 1.0, %v681
    %v714 = vsel %vm520, 1.0, %v682
    %v715 = vsel %vm521, 1.0, %v683
    %v716 = vsel %vm522, 1.0, %v684
    %v717 = vsel %vm523, 1.0, %v685
    %v718 = vsel %vm524, 1.0, %v686
    %v719 = vsel %vm525, 1.0, %v687
    %v720 = vsel %vm526, 1.0, %v688
    %v721 = vsel %vm527, 1.0, %v689
    %v722 = vsel %vm528, 1.0, %v690
    %v723 = vsel %vm529, 1.0, %v691
    %v724 = vsel %vm530, 1.0, %v692
    %v725 = vsel %vm531, 1.0, %v693
    %v726 = vsel %vm532, 1.0, %v694
    %v727 = vsel %vm533, 1.0, %v695
    %v728 = vmul.f32 %v469, %v696
    %v729 = vmul.f32 %v470, %v697
    %v730 = vmul.f32 %v471, %v698
    %v731 = vmul.f32 %v472, %v699
    %v732 = vmul.f32 %v473, %v700
    %v733 = vmul.f32 %v474, %v701
    %v734 = vmul.f32 %v475, %v702
    %v735 = vmul.f32 %v476, %v703
    %v736 = vmul.f32 %v477, %v704
    %v737 = vmul.f32 %v478, %v705
    %v738 = vmul.f32 %v479, %v706
    %v739 = vmul.f32 %v480, %v707
    %v740 = vmul.f32 %v481, %v708
    %v741 = vmul.f32 %v482, %v709
    %v742 = vmul.f32 %v483, %v710
    %v743 = vmul.f32 %v484, %v711
    %v744 = vmul.f32 %v485, %v712
    %v745 = vmul.f32 %v486, %v713
    %v746 = vmul.f32 %v487, %v714
    %v747 = vmul.f32 %v488, %v715
    %v748 = vmul.f32 %v489, %v716
    %v749 = vmul.f32 %v490, %v717
    %v750 = vmul.f32 %v491, %v718
    %v751 = vmul.f32 %v492, %v719
    %v752 = vmul.f32 %v493, %v720
    %v753 = vmul.f32 %v494, %v721
    %v754 = vmul.f32 %v495, %v722
    %v755 = vmul.f32 %v496, %v723
    %v756 = vmul.f32 %v497, %v724
    %v757 = vmul.f32 %v498, %v725
    %v758 = vmul.f32 %v499, %v726
    %v759 = vmul.f32 %v500, %v727
    %v760 = vadd.f32 %v728, %v732
    %v761 = vadd.f32 %v729, %v733
    %v762 = vadd.f32 %v730, %v734
    %v763 = vadd.f32 %v731, %v735
    %v764 = vadd.f32 %v760, %v736
    %v765 = vadd.f32 %v761, %v737
    %v766 = vadd.f32 %v762, %v738
    %v767 = vadd.f32 %v763, %v739
    %v768 = vadd.f32 %v764, %v740
    %v769 = vadd.f32 %v765, %v741
    %v770 = vadd.f32 %v766, %v742
    %v771 = vadd.f32 %v767, %v743
    %v772 = vadd.f32 %v768, %v744
    %v773 = vadd.f32 %v769, %v745
    %v774 = vadd.f32 %v770, %v746
    %v775 = vadd.f32 %v771, %v747
    %v776 = vadd.f32 %v772, %v748
    %v777 = vadd.f32 %v773, %v749
    %v778 = vadd.f32 %v774, %v750
    %v779 = vadd.f32 %v775, %v751
    %v780 = vadd.f32 %v776, %v752
    %v781 = vadd.f32 %v777, %v753
    %v782 = vadd.f32 %v778, %v754
    %v783 = vadd.f32 %v779, %v755
    %v784 = vadd.f32 %v780, %v756
    %v785 = vadd.f32 %v781, %v757
    %v786 = vadd.f32 %v782, %v758
    %v787 = vadd.f32 %v783, %v759
    %v788 = vld [vmem:[#allocation2] sm:$0xff]
    %v789 = vld [vmem:[#allocation2 + $0x8] sm:$0xff]
    %v790 = vld [vmem:[#allocation2 + $0x10] sm:$0xff]
    %v791 = vld [vmem:[#allocation2 + $0x18] sm:$0xff]
    %v792 = vadd.f32 %v788, %v784
    %v793 = vadd.f32 %v789, %v785
    %v794 = vadd.f32 %v790, %v786
    %v795 = vadd.f32 %v791, %v787
    %796 = vst [vmem:[#allocation2] sm:$0xff] %v792
    %797 = vst [vmem:[#allocation2 + $0x8] sm:$0xff] %v793
    %798 = vst [vmem:[#allocation2 + $0x10] sm:$0xff] %v794
    %799 = vst [vmem:[#allocation2 + $0x18] sm:$0xff] %v795
    // Predicated region
    $region30: #{tpu_custom_call.1} parent=1 // pred_check
      %p800 = pneg %p74
    $region31: #{tpu_custom_call.1} parent=1 // pred_check_branch
      %802 = sbr.rel (%p800) target = $region33
    $region32: #{tpu_custom_call.1} parent=1 // pred_region
      %v803 = vld [vmem:[#allocation2] sm:$0xff]
      %v804 = vld [vmem:[#allocation2 + $0x8] sm:$0xff]
      %v805 = vld [vmem:[#allocation2 + $0x10] sm:$0xff]
      %v806 = vld [vmem:[#allocation2 + $0x18] sm:$0xff]
      %v807 = vadd.f32 %v803, %v804
      %v808 = vadd.f32 %v807, %v805
      %v809 = vadd.f32 %v808, %v806
      %810 = vadd.xlane.f32.xlu0 %v809
      %v811 = vpop.xlane.xlu0 %810
      %v812 = vrot.slane %v811, 4
      %v813 = vadd.f32 %v811, %v812
      %v814 = vrot.slane %v813, 2
      %v815 = vadd.f32 %v813, %v814
      %v816 = vrot.slane %v815, 1
      %v817 = vadd.f32 %v815, %v816
      %s818 = vtos %v817
      %v819 = vstv %s818
      %820 = vst [vmem:[#allocation10] sm:$0xff] %v819
    $region33: #{tpu_custom_call.1} parent=1 // pred_fallthru
      _
    // Predicated region
    $region34: #{tpu_custom_call.1} parent=1 // pred_check
      _
    $region35: #{tpu_custom_call.1} parent=1 // pred_check_branch
      %822 = sbr.rel (0) target = $region37
    $region36: #{tpu_custom_call.1} parent=1 // pred_region
      %824 = vsyncadd [#allocation5], 0
      %s826 = sshll.u32 [#allocation10], 4
      %s827 = int_to_ptr.vmem [resolvable:$true] %s826
      %s828 = sshll.u32 %s3, 4
      %s829 = int_to_ptr.hbm [resolvable:$true] %s828
      %831 = dma.vmem_to_hbm [thread:$0]  %s827, 128, %s829, [#allocation5]
    $region37: #{tpu_custom_call.1} parent=1 // pred_fallthru
      _
    // Predicated region
    $region38: #{tpu_custom_call.1} parent=1 // pred_check
      _
    $region39: #{tpu_custom_call.1} parent=1 // pred_check_branch
      %833 = sbr.rel (0) target = $region41
    $region40: #{tpu_custom_call.1} parent=1 // pred_region
      %835 = dma.done [#allocation5], 128
    $region41: #{tpu_custom_call.1} parent=1 // pred_fallthru
      _
    %836 = vsyncpa [#allocation4], 1
    %837 = vsyncpa [#allocation9], 1
    %838 = vsyncpa [#allocation5], 1
    %839 = vsyncpa [#allocation6], 1

</llo_original>
